<compile_context>
chip_gen: v7x
topology: tpu7x:2x2x1
jax: 0.10.0
libtpu: 0.0.40
codegen_flags: <defaults>
</compile_context>

<pallas_src>
import functools

import jax
import jax.numpy as jnp
from jax.experimental import pallas as pl
from jax.experimental.pallas import tpu as pltpu


def _round_up(a: int, b: int) -> int:
    return -(-a // b) * b


def _tpu_vmem_capacity():
    """Physical VMEM bytes per core, or None if the query is unavailable."""
    try:
        return int(pltpu.get_tpu_info().vmem_capacity_bytes)
    except Exception:
        return None


def _small_vmem_part() -> bool:
    """True on 64 MiB-VMEM parts (v7x-class); also used as a megacore hint."""
    cap = _tpu_vmem_capacity()
    return cap is not None and cap < (96 << 20)


# ---------------------------------------------------------------------------
# Kernels
# ---------------------------------------------------------------------------

def _ffn_kernel_accout(x_ref, w13_ref, w2_ref, o_ref, *, th, compute_dtype):
    """f32-output path: accumulate directly into the VMEM-resident output tile."""
    k = pl.program_id(1)

    @pl.when(k == 0)
    def _():
        o_ref[...] = jnp.zeros_like(o_ref)

    x = x_ref[...].astype(compute_dtype)           # in-kernel cast (no wrapper pass)
    # Fused gate/up projection: one wide MXU matmul, f32 accumulation.
    h = jnp.dot(x, w13_ref[0], preferred_element_type=jnp.float32)   # (tm, 2*th)
    h1 = h[:, :th]
    h3 = h[:, th:]
    gated = (h1 * jax.nn.sigmoid(h1)) * h3          # SiLU gate in f32 (VPU/EUP)
    # Down projection for this hidden tile, accumulated in f32 in the output.
    o_ref[...] += jnp.dot(gated.astype(compute_dtype), w2_ref[0],
                          preferred_element_type=jnp.float32)


def _ffn_kernel_scratch(x_ref, w13_ref, w2_ref, o_ref, acc_ref, *, th, compute_dtype):
    """Non-f32-output path: f32 scratch accumulator, single cast on last k step."""
    k = pl.program_id(1)

    @pl.when(k == 0)
    def _():
        acc_ref[...] = jnp.zeros_like(acc_ref)

    x = x_ref[...].astype(compute_dtype)
    h = jnp.dot(x, w13_ref[0], preferred_element_type=jnp.float32)
    h1 = h[:, :th]
    h3 = h[:, th:]
    gated = (h1 * jax.nn.sigmoid(h1)) * h3
    acc_ref[...] += jnp.dot(gated.astype(compute_dtype), w2_ref[0],
                            preferred_element_type=jnp.float32)

    @pl.when(k == pl.num_programs(1) - 1)
    def _():
        o_ref[...] = acc_ref[...].astype(o_ref.dtype)


# ---------------------------------------------------------------------------
# Weight preparation (one-time, outside the hot path)
# ---------------------------------------------------------------------------

def prepare_weights(w1, w3, w2, *, th=None, compute_dtype=jnp.bfloat16):
    """Transpose to (in, out), cast to bf16, pad hidden to a multiple of th,
    fuse w1/w3 per hidden tile as [w1 cols | w3 cols], and store PRE-TILED so
    every weight-tile DMA is fully contiguous.

    w1, w3: (hidden, dim); w2: (dim, hidden)  [PyTorch nn.Linear layout].
    Returns (w13, w2_t, th) with
      w13:  (nh, dim, 2*th)   tile k = [w1 tile k | w3 tile k]
      w2_t: (nh, th, dim)
    """
    hidden, dim = w1.shape
    assert w3.shape == (hidden, dim) and w2.shape == (dim, hidden)

    if th is None:
        # v7x-class (64 MiB VMEM/TC): th=256 ; v5e/v6e (128 MiB): th=512.
        th = 256 if _small_vmem_part() else 512
    th = max(128, min(_round_up(th, 128), _round_up(hidden, 128)))
    hidden_p = _round_up(hidden, th)
    nh = hidden_p // th

    w1_t = w1.T.astype(compute_dtype)               # (dim, hidden)
    w3_t = w3.T.astype(compute_dtype)               # (dim, hidden)
    w2_t = w2.T.astype(compute_dtype)               # (hidden, dim)
    if hidden_p != hidden:
        pad = hidden_p - hidden
        # zero-padded hidden units contribute exactly 0 to the output
        w1_t = jnp.pad(w1_t, ((0, 0), (0, pad)))
        w3_t = jnp.pad(w3_t, ((0, 0), (0, pad)))
        w2_t = jnp.pad(w2_t, ((0, pad), (0, 0)))

    # Pre-tiled, contiguous per hidden tile.
    w13 = jnp.concatenate(
        [w1_t.reshape(dim, nh, th), w3_t.reshape(dim, nh, th)], axis=2
    ).transpose(1, 0, 2)                             # (nh, dim, 2*th)
    w2_tiled = w2_t.reshape(nh, th, dim)             # (nh, th, dim)
    return w13, w2_tiled, th


# ---------------------------------------------------------------------------
# Forward
# ---------------------------------------------------------------------------

def feed_forward(x, w13, w2_t, *, th, tm=512, compute_dtype=jnp.bfloat16,
                 vmem_limit_bytes=None, weight_buffer_count=None):
    """x: (..., dim); w13: (nh, dim, 2*th); w2_t: (nh, th, dim).

    tm: token tile. Default 512 keeps large-M compute-bound on all current
        generations (use 256-512 on v5e, 512-1024 on v6e, 512 on v7x).
    th: hidden tile chosen in prepare_weights (256 on v7x, 512 on v5e/v6e).
    weight_buffer_count: optional pipeline depth (e.g. 3) for the weight
        BlockSpecs if profiling shows DMA waits at k-step boundaries.
    """
    orig_dtype = x.dtype
    orig_shape = x.shape
    dim = x.shape[-1]
    nh, th2, dim2 = w2_t.shape
    assert dim2 == dim and th2 == th
    assert w13.shape == (nh, dim, 2 * th)

    x2d = x.reshape(-1, dim)
    M = x2d.shape[0]
    tm_eff = min(tm, _round_up(M, 16))               # don't over-tile tiny M
    # v7x has 2 TensorCores: make sure the "parallel" M axis has >= 2 tiles
    # whenever M is large enough, so both cores get work.
    if _small_vmem_part() and M >= 256 and _round_up(M, tm_eff) // tm_eff < 2:
        tm_eff = max(128, _round_up(-(-M // 2), 16))
    # TODO(synk): for decode-sized M on v7x, split the hidden (k) axis across
    # the two TensorCores (core_map + per-core partial sums) instead.
    Mp = _round_up(M, tm_eff)
    if Mp != M:
        x2d = jnp.pad(x2d, ((0, Mp - M), (0, 0)))
    # NOTE: x stays in its original dtype; the bf16 cast happens in-kernel.

    use_scratch_acc = jnp.dtype(orig_dtype) != jnp.dtype(jnp.float32)
    out_dtype = orig_dtype if use_scratch_acc else jnp.float32

    if vmem_limit_bytes is None:
        x_b = jnp.dtype(orig_dtype).itemsize
        c_b = jnp.dtype(compute_dtype).itemsize
        o_b = jnp.dtype(out_dtype).itemsize
        est = 2 * tm_eff * dim * x_b                          # x double buffer
        est += 2 * (dim * 2 * th + th * dim) * c_b            # weight double buffers
        est += 2 * tm_eff * dim * o_b                         # output buffers
        if use_scratch_acc:
            est += tm_eff * dim * 4                           # f32 accumulator
        est += tm_eff * 2 * th * 4 * 2                        # f32 h / gate temps
        cap = _tpu_vmem_capacity() or (64 << 20)              # conservative if unknown
        vmem_limit_bytes = min(int(est * 1.5) + (8 << 20), int(cap * 0.9))

    def _wspec(shape):
        if weight_buffer_count is not None:
            return pl.BlockSpec(shape, lambda i, k: (k, 0, 0),
                                pipeline_mode=pl.Buffered(weight_buffer_count))
        return pl.BlockSpec(shape, lambda i, k: (k, 0, 0))

    if use_scratch_acc:
        kernel = functools.partial(_ffn_kernel_scratch, th=th,
                                   compute_dtype=compute_dtype)
        scratch = [pltpu.VMEM((tm_eff, dim), jnp.float32)]
    else:
        kernel = functools.partial(_ffn_kernel_accout, th=th,
                                   compute_dtype=compute_dtype)
        scratch = []

    out2d = pl.pallas_call(
        kernel,
        out_shape=jax.ShapeDtypeStruct((Mp, dim), out_dtype),
        grid_spec=pltpu.PrefetchScalarGridSpec(
            num_scalar_prefetch=0,
            grid=(Mp // tm_eff, nh),             # M tiles (parallel), hidden (reduction)
            in_specs=[
                pl.BlockSpec((tm_eff, dim), lambda i, k: (i, 0)),   # x tile (fixed over k)
                _wspec((1, dim, 2 * th)),                           # fused [w1|w3] tile k
                _wspec((1, th, dim)),                               # w2 tile k
            ],
            out_specs=pl.BlockSpec((tm_eff, dim), lambda i, k: (i, 0)),
            scratch_shapes=scratch,
        ),
        compiler_params=pltpu.CompilerParams(
            dimension_semantics=("parallel", "arbitrary"),
            vmem_limit_bytes=vmem_limit_bytes,
        ),
    )(x2d, w13, w2_t)

    return out2d[:M].reshape(orig_shape).astype(orig_dtype)


# ---------------------------------------------------------------------------
# Parameter construction + reference
# ---------------------------------------------------------------------------

def make_params(key, dim, hidden_dim, multiple_of, dtype=jnp.float32):
    """Replicates FeedForward.__init__ hidden_dim arithmetic; deterministic init."""
    hidden_dim = int(2 * hidden_dim / 3)
    hidden_dim = multiple_of * ((hidden_dim + multiple_of - 1) // multiple_of)
    k1, k2, k3 = jax.random.split(key, 3)
    # PyTorch nn.Linear weight layout: (out_features, in_features)
    w1 = jax.random.normal(k1, (hidden_dim, dim), dtype) * 0.02
    w3 = jax.random.normal(k2, (hidden_dim, dim), dtype) * 0.02
    w2 = jax.random.normal(k3, (dim, hidden_dim), dtype) * 0.02
    return w1, w3, w2


def _reference(x, w1, w3, w2):
    h1 = x @ w1.T
    h3 = x @ w3.T
    return (jax.nn.silu(h1) * h3) @ w2.T


if __name__ == "__main__":
    dim = 128
    hidden_dim_arg = 256      # -> int(2*256/3)=170 -> rounded to 256 with multiple_of=128
    multiple_of = 128
    batch, seq = 2, 8

    key = jax.random.PRNGKey(0)
    kx, kp = jax.random.split(key)
    x = jax.random.normal(kx, (batch, seq, dim), jnp.float32)
    w1, w3, w2 = make_params(kp, dim, hidden_dim_arg, multiple_of)

    # One-time weight prep (transpose + fuse + pre-tile + bf16 cast).
    w13, w2_t, th = prepare_weights(w1, w3, w2)

    out = feed_forward(x, w13, w2_t, th=th)
    out = jax.block_until_ready(out)

    # Reference in f32 using bf16-rounded inputs (kernel matmuls run in bf16
    # with f32 accumulation; gate/accumulator stay f32).
    def _r(a):
        return a.astype(jnp.bfloat16).astype(jnp.float32)
    ref = _reference(_r(x), _r(w1), _r(w3), _r(w2))

    assert out.shape == ref.shape == (batch, seq, dim)
    assert jnp.allclose(out, ref, atol=2e-3, rtol=2e-2), "mismatch vs reference"

    print("KERNEL_OK")
</pallas_src>

<mosaic_0001>
module attributes {stable_mosaic.version = 11 : i64} {
  func.func @_ffn_kernel_accout(%arg0: i32, %arg1: i32, %arg2: memref<16x128xf32, #tpu.memory_space<vmem>>, %arg3: memref<1x128x512xbf16, #tpu.memory_space<vmem>>, %arg4: memref<1x256x128xbf16, #tpu.memory_space<vmem>>, %arg5: memref<16x128xf32, #tpu.memory_space<vmem>>) attributes {dimension_semantics = [#tpu.dimension_semantics<parallel>, #tpu.dimension_semantics<arbitrary>], iteration_bounds = array<i64: 1, 1>, scalar_prefetch = 0 : i64, scratch_operands = 0 : i64, tpu.core_type = #tpu.core_type<tc>, window_params = [{transform_indices = @transform_0, window_bounds = array<i64: 16, 128>}, {transform_indices = @transform_1, window_bounds = array<i64: 1, 128, 512>}, {transform_indices = @transform_2, window_bounds = array<i64: 1, 256, 128>}, {transform_indices = @transform_3, window_bounds = array<i64: 16, 128>}]} {
    %c0_i32 = arith.constant 0 : i32
    %0 = arith.cmpi eq, %arg1, %c0_i32 : i32
    %1 = arith.extui %0 : i1 to i32
    %c0_i32_0 = arith.constant 0 : i32
    %2 = arith.cmpi ne, %1, %c0_i32_0 : i32
    scf.if %2 {
      %cst_14 = arith.constant 0.000000e+00 : f32
      %24 = vector.broadcast %cst_14 : f32 to vector<16x128xf32>
      %c0_15 = arith.constant 0 : index
      %c0_16 = arith.constant 0 : index
      %25 = vector.load %arg5[%c0_15, %c0_16] : memref<16x128xf32, #tpu.memory_space<vmem>>, vector<16x128xf32>
      tpu.vector_store %arg5[%c0_15, %c0_16], %24 {strides = array<i32>} : memref<16x128xf32, #tpu.memory_space<vmem>>, vector<16x128xf32>,
    } else {
    }
    %c0 = arith.constant 0 : index
    %c0_1 = arith.constant 0 : index
    %3 = vector.load %arg2[%c0, %c0_1] : memref<16x128xf32, #tpu.memory_space<vmem>>, vector<16x128xf32>
    %4 = arith.truncf %3 : vector<16x128xf32> to vector<16x128xbf16>
    %c0_2 = arith.constant 0 : index
    %c0_3 = arith.constant 0 : index
    %c0_4 = arith.constant 0 : index
    %5 = vector.load %arg3[%c0_2, %c0_3, %c0_4] : memref<1x128x512xbf16, #tpu.memory_space<vmem>>, vector<1x128x512xbf16>
    %6 = vector.shape_cast %5 : vector<1x128x512xbf16> to vector<128x512xbf16>
    %cst = arith.constant dense<0.000000e+00> : vector<16x512xf32>
    %7 = tpu.matmul %4, %6, %cst {dimension_numbers = #tpu.dot_dimension_numbers<[1], [0], [0], [1], [0, 0, 1, 1], [], []>} : vector<16x128xbf16>, vector<128x512xbf16>, vector<16x512xf32> -> vector<16x512xf32>
    %8 = vector.extract_strided_slice %7 {offsets = [0, 0], sizes = [16, 256], strides = [1, 1]} : vector<16x512xf32> to vector<16x256xf32>
    %9 = vector.extract_strided_slice %7 {offsets = [0, 256], sizes = [16, 256], strides = [1, 1]} : vector<16x512xf32> to vector<16x256xf32>
    %10 = arith.negf %8 : vector<16x256xf32>
    %11 = math.exp %10 : vector<16x256xf32>
    %cst_5 = arith.constant 1.000000e+00 : f32
    %12 = vector.broadcast %cst_5 : f32 to vector<16x256xf32>
    %13 = arith.addf %12, %11 : vector<16x256xf32>
    %14 = arith.divf %12, %13 : vector<16x256xf32>
    %15 = arith.mulf %8, %14 : vector<16x256xf32>
    %16 = arith.mulf %15, %9 : vector<16x256xf32>
    %c0_6 = arith.constant 0 : index
    %c0_7 = arith.constant 0 : index
    %17 = vector.load %arg5[%c0_6, %c0_7] : memref<16x128xf32, #tpu.memory_space<vmem>>, vector<16x128xf32>
    %18 = arith.truncf %16 : vector<16x256xf32> to vector<16x256xbf16>
    %c0_8 = arith.constant 0 : index
    %c0_9 = arith.constant 0 : index
    %c0_10 = arith.constant 0 : index
    %19 = vector.load %arg4[%c0_8, %c0_9, %c0_10] : memref<1x256x128xbf16, #tpu.memory_space<vmem>>, vector<1x256x128xbf16>
    %20 = vector.shape_cast %19 : vector<1x256x128xbf16> to vector<256x128xbf16>
    %cst_11 = arith.constant dense<0.000000e+00> : vector<16x128xf32>
    %21 = tpu.matmul %18, %20, %cst_11 {dimension_numbers = #tpu.dot_dimension_numbers<[1], [0], [0], [1], [0, 0, 1, 1], [], []>} : vector<16x256xbf16>, vector<256x128xbf16>, vector<16x128xf32> -> vector<16x128xf32>
    %22 = arith.addf %17, %21 : vector<16x128xf32>
    %c0_12 = arith.constant 0 : index
    %c0_13 = arith.constant 0 : index
    %23 = vector.load %arg5[%c0_12, %c0_13] : memref<16x128xf32, #tpu.memory_space<vmem>>, vector<16x128xf32>
    tpu.vector_store %arg5[%c0_12, %c0_13], %22 {strides = array<i32>} : memref<16x128xf32, #tpu.memory_space<vmem>>, vector<16x128xf32>,
    return
  }
  func.func @transform_0(%arg0: i32, %arg1: i32) -> (i32, i32) {
    %c0_i32 = arith.constant 0 : i32
    %c0_i32_0 = arith.constant 0 : i32
    return %arg0, %c0_i32 : i32, i32
  }
  func.func @transform_1(%arg0: i32, %arg1: i32) -> (i32, i32, i32) {
    %c0_i32 = arith.constant 0 : i32
    %c0_i32_0 = arith.constant 0 : i32
    %c0_i32_1 = arith.constant 0 : i32
    return %arg1, %c0_i32, %c0_i32_0 : i32, i32, i32
  }
  func.func @transform_2(%arg0: i32, %arg1: i32) -> (i32, i32, i32) {
    %c0_i32 = arith.constant 0 : i32
    %c0_i32_0 = arith.constant 0 : i32
    %c0_i32_1 = arith.constant 0 : i32
    return %arg1, %c0_i32, %c0_i32_0 : i32, i32, i32
  }
  func.func @transform_3(%arg0: i32, %arg1: i32) -> (i32, i32) {
    %c0_i32 = arith.constant 0 : i32
    %c0_i32_0 = arith.constant 0 : i32
    return %arg0, %c0_i32 : i32, i32
  }
}

</mosaic_0001>

<llo_original>
// kernel: tpu_custom_call.1
$region0: #{tpu_custom_call.1}
  #allocation0 [shape = 'u32[]', space=smem, size = 0x4, offset = 0x4, fixed_abs, tag = 'smem constant byte address 0x4 - core index']
  #allocation1 [shape = 'u32[144,128]{1,0:T(1,128)}', space=vmem, size = 0x12000, scoped, tag = 'internal scratch']
  %s0 = inlined_call_operand.hbm [shape: f32[16,128], index: 0, kind: input, shape index: {}]
  %s1 = inlined_call_operand.hbm [shape: bf16[1,128,512], index: 1, kind: input, shape index: {}]
  %s2 = inlined_call_operand.hbm [shape: bf16[1,256,128], index: 2, kind: input, shape index: {}]
  %s3 = inlined_call_operand.hbm [shape: f32[16,128], index: 3, kind: output, shape index: {}]
  %s4 = sld [smem:[#allocation0]]
  $region38: #{tpu_custom_call.1} parent=0
    _
  %s6 = ssub.s32 1, %s4
  %s7 = scalar_select 0, %s6, %s4
  $region1: #{tpu_custom_call.1} parent=0
    #allocation2 [shape = 'u8[8192]{0}', space=vmem, size = 0x2000, scoped, tag = 'input window, operand 0, single buffered']
    #allocation3 [shape = 's32[1]{0}', space=sflag, size = 0x4, scoped, tag = 'scoped memory for tpu_custom_call.1']
    #allocation4 [shape = 's32[1]{0}', space=sflag, size = 0x4, scoped, tag = 'scoped memory for tpu_custom_call.1']
    #allocation5 [shape = 'u8[131072]{0}', space=vmem, size = 0x20000, scoped, tag = 'input window, operand 1, single buffered']
    #allocation6 [shape = 's32[1]{0}', space=sflag, size = 0x4, scoped, tag = 'scoped memory for tpu_custom_call.1']
    #allocation7 [shape = 'u8[65536]{0}', space=vmem, size = 0x10000, scoped, tag = 'input window, operand 2, single buffered']
    #allocation8 [shape = 'u8[8192]{0}', space=vmem, size = 0x2000, scoped, tag = 'output window, operand 0, single buffered']
    %8 = vsyncpa [#allocation3], 0
    %9 = vsyncpa [#allocation6], 0
    %10 = vsyncpa [#allocation4], 0
    // Predicated region
    $region2: #{tpu_custom_call.1} parent=1 // pred_check
      _
    $region3: #{tpu_custom_call.1} parent=1 // pred_check_branch
      %12 = sbr.rel (0) target = $region5
    $region4: #{tpu_custom_call.1} parent=1 // pred_region
      %s14 = ssub.s32 256, 256
      %15 = vsyncadd [#allocation3], %s14
      %s16 = sshll.u32 [#allocation2], 4
      %s17 = int_to_ptr.vmem [resolvable:$true] %s16
      %22 = dma.hbm_to_vmem [thread:$0]  %s0, 256, %s17, [#allocation3], 128, 128, 8
    $region5: #{tpu_custom_call.1} parent=1 // pred_fallthru
      _
    // Predicated region
    $region6: #{tpu_custom_call.1} parent=1 // pred_check
      _
    $region7: #{tpu_custom_call.1} parent=1 // pred_check_branch
      %24 = sbr.rel (0) target = $region9
    $region8: #{tpu_custom_call.1} parent=1 // pred_region
      %s26 = ssub.s32 4096, 4096
      %27 = vsyncadd [#allocation6], %s26
      %s28 = sshll.u32 [#allocation5], 4
      %s29 = int_to_ptr.vmem [resolvable:$true] %s28
      %34 = dma.hbm_to_vmem [thread:$0]  %s1, 4096, %s29, [#allocation6], 256, 256, 16
    $region9: #{tpu_custom_call.1} parent=1 // pred_fallthru
      _
    // Predicated region
    $region10: #{tpu_custom_call.1} parent=1 // pred_check
      _
    $region11: #{tpu_custom_call.1} parent=1 // pred_check_branch
      %36 = sbr.rel (0) target = $region13
    $region12: #{tpu_custom_call.1} parent=1 // pred_region
      %s38 = ssub.s32 2048, 2048
      %39 = vsyncadd [#allocation6], %s38
      %s40 = sshll.u32 [#allocation7], 4
      %s41 = int_to_ptr.vmem [resolvable:$true] %s40
      %46 = dma.hbm_to_vmem [thread:$0]  %s2, 2048, %s41, [#allocation6], 64, 64, 4
    $region13: #{tpu_custom_call.1} parent=1 // pred_fallthru
      _
    // Predicated region
    $region14: #{tpu_custom_call.1} parent=1 // pred_check
      _
    $region15: #{tpu_custom_call.1} parent=1 // pred_check_branch
      %48 = sbr.rel (0) target = $region17
    $region16: #{tpu_custom_call.1} parent=1 // pred_region
      %49 = dma.done [#allocation3], 256
    $region17: #{tpu_custom_call.1} parent=1 // pred_fallthru
      _
    // Predicated region
    $region18: #{tpu_custom_call.1} parent=1 // pred_check
      _
    $region19: #{tpu_custom_call.1} parent=1 // pred_check_branch
      %51 = sbr.rel (0) target = $region21
    $region20: #{tpu_custom_call.1} parent=1 // pred_region
      %52 = dma.done [#allocation6], 4096
    $region21: #{tpu_custom_call.1} parent=1 // pred_fallthru
      _
    // Predicated region
    $region22: #{tpu_custom_call.1} parent=1 // pred_check
      _
    $region23: #{tpu_custom_call.1} parent=1 // pred_check_branch
      %54 = sbr.rel (0) target = $region25
    $region24: #{tpu_custom_call.1} parent=1 // pred_region
      %55 = dma.done [#allocation6], 2048
    $region25: #{tpu_custom_call.1} parent=1 // pred_fallthru
      _
    %p57 = scmp.eq.s32.totalorder 0, 0
    // Predicated region
    $region26: #{tpu_custom_call.1} parent=1 // pred_check
      %p58 = pneg %p57
    $region27: #{tpu_custom_call.1} parent=1 // pred_check_branch
      %60 = sbr.rel (%p58) target = $region29
    $region28: #{tpu_custom_call.1} parent=1 // pred_region
      %61 = vst [vmem:[#allocation8] sm:$0xff] 0.0
      %62 = vst [vmem:[#allocation8 + $0x8] sm:$0xff] 0.0
    $region29: #{tpu_custom_call.1} parent=1 // pred_fallthru
      _
    %v63 = vld [vmem:[#allocation2] sm:$0xff]
    %v64 = vld [vmem:[#allocation2 + $0x8] sm:$0xff]
    %v65 = vpack.c.bf16 %v64, %v63
    %v66 = vld [vmem:[#allocation5] sm:$0xff]
    %v67 = vld [vmem:[#allocation5 + $0x8] sm:$0xff]
    %v68 = vld [vmem:[#allocation5 + $0x10] sm:$0xff]
    %v69 = vld [vmem:[#allocation5 + $0x18] sm:$0xff]
    %v70 = vld [vmem:[#allocation5 + $0x20] sm:$0xff]
    %v71 = vld [vmem:[#allocation5 + $0x28] sm:$0xff]
    %v72 = vld [vmem:[#allocation5 + $0x30] sm:$0xff]
    %v73 = vld [vmem:[#allocation5 + $0x38] sm:$0xff]
    %v74 = vld [vmem:[#allocation5 + $0x40] sm:$0xff]
    %v75 = vld [vmem:[#allocation5 + $0x48] sm:$0xff]
    %v76 = vld [vmem:[#allocation5 + $0x50] sm:$0xff]
    %v77 = vld [vmem:[#allocation5 + $0x58] sm:$0xff]
    %v78 = vld [vmem:[#allocation5 + $0x60] sm:$0xff]
    %v79 = vld [vmem:[#allocation5 + $0x68] sm:$0xff]
    %v80 = vld [vmem:[#allocation5 + $0x70] sm:$0xff]
    %v81 = vld [vmem:[#allocation5 + $0x78] sm:$0xff]
    %v82 = vld [vmem:[#allocation5 + $0x80] sm:$0xff]
    %v83 = vld [vmem:[#allocation5 + $0x88] sm:$0xff]
    %v84 = vld [vmem:[#allocation5 + $0x90] sm:$0xff]
    %v85 = vld [vmem:[#allocation5 + $0x98] sm:$0xff]
    %v86 = vld [vmem:[#allocation5 + $0xa0] sm:$0xff]
    %v87 = vld [vmem:[#allocation5 + $0xa8] sm:$0xff]
    %v88 = vld [vmem:[#allocation5 + $0xb0] sm:$0xff]
    %v89 = vld [vmem:[#allocation5 + $0xb8] sm:$0xff]
    %v90 = vld [vmem:[#allocation5 + $0xc0] sm:$0xff]
    %v91 = vld [vmem:[#allocation5 + $0xc8] sm:$0xff]
    %v92 = vld [vmem:[#allocation5 + $0xd0] sm:$0xff]
    %v93 = vld [vmem:[#allocation5 + $0xd8] sm:$0xff]
    %v94 = vld [vmem:[#allocation5 + $0xe0] sm:$0xff]
    %v95 = vld [vmem:[#allocation5 + $0xe8] sm:$0xff]
    %v96 = vld [vmem:[#allocation5 + $0xf0] sm:$0xff]
    %v97 = vld [vmem:[#allocation5 + $0xf8] sm:$0xff]
    %v130 = vunpack.c.l.b16 %v66
    %v131 = vunpack.c.h.b16 %v66
    %v132 = vunpack.c.l.b16 %v67
    %v133 = vunpack.c.h.b16 %v67
    %v134 = vunpack.c.l.b16 %v68
    %v135 = vunpack.c.h.b16 %v68
    %v136 = vunpack.c.l.b16 %v69
    %v137 = vunpack.c.h.b16 %v69
    %v138 = vunpack.c.l.b16 %v70
    %v139 = vunpack.c.h.b16 %v70
    %v140 = vunpack.c.l.b16 %v71
    %v141 = vunpack.c.h.b16 %v71
    %v142 = vunpack.c.l.b16 %v72
    %v143 = vunpack.c.h.b16 %v72
    %v144 = vunpack.c.l.b16 %v73
    %v145 = vunpack.c.h.b16 %v73
    %v146 = vunpack.c.l.b16 %v74
    %v147 = vunpack.c.h.b16 %v74
    %v148 = vunpack.c.l.b16 %v75
    %v149 = vunpack.c.h.b16 %v75
    %v150 = vunpack.c.l.b16 %v76
    %v151 = vunpack.c.h.b16 %v76
    %v152 = vunpack.c.l.b16 %v77
    %v153 = vunpack.c.h.b16 %v77
    %v154 = vunpack.c.l.b16 %v78
    %v155 = vunpack.c.h.b16 %v78
    %v156 = vunpack.c.l.b16 %v79
    %v157 = vunpack.c.h.b16 %v79
    %v158 = vunpack.c.l.b16 %v80
    %v159 = vunpack.c.h.b16 %v80
    %v160 = vunpack.c.l.b16 %v81
    %v161 = vunpack.c.h.b16 %v81
    %v162 = vunpack.c.l.b16 %v82
    %v163 = vunpack.c.h.b16 %v82
    %v164 = vunpack.c.l.b16 %v83
    %v165 = vunpack.c.h.b16 %v83
    %v166 = vunpack.c.l.b16 %v84
    %v167 = vunpack.c.h.b16 %v84
    %v168 = vunpack.c.l.b16 %v85
    %v169 = vunpack.c.h.b16 %v85
    %v170 = vunpack.c.l.b16 %v86
    %v171 = vunpack.c.h.b16 %v86
    %v172 = vunpack.c.l.b16 %v87
    %v173 = vunpack.c.h.b16 %v87
    %v174 = vunpack.c.l.b16 %v88
    %v175 = vunpack.c.h.b16 %v88
    %v176 = vunpack.c.l.b16 %v89
    %v177 = vunpack.c.h.b16 %v89
    %v178 = vunpack.c.l.b16 %v90
    %v179 = vunpack.c.h.b16 %v90
    %v180 = vunpack.c.l.b16 %v91
    %v181 = vunpack.c.h.b16 %v91
    %v182 = vunpack.c.l.b16 %v92
    %v183 = vunpack.c.h.b16 %v92
    %v184 = vunpack.c.l.b16 %v93
    %v185 = vunpack.c.h.b16 %v93
    %v186 = vunpack.c.l.b16 %v94
    %v187 = vunpack.c.h.b16 %v94
    %v188 = vunpack.c.l.b16 %v95
    %v189 = vunpack.c.h.b16 %v95
    %v190 = vunpack.c.l.b16 %v96
    %v191 = vunpack.c.h.b16 %v96
    %v192 = vunpack.c.l.b16 %v97
    %v193 = vunpack.c.h.b16 %v97
    %v194 = vpack.c.b16 %v134, %v130
    %v195 = vpack.c.b16 %v135, %v131
    %v196 = vpack.c.b16 %v136, %v132
    %v197 = vpack.c.b16 %v137, %v133
    %v198 = vpack.c.b16 %v142, %v138
    %v199 = vpack.c.b16 %v143, %v139
    %v200 = vpack.c.b16 %v144, %v140
    %v201 = vpack.c.b16 %v145, %v141
    %v202 = vpack.c.b16 %v150, %v146
    %v203 = vpack.c.b16 %v151, %v147
    %v204 = vpack.c.b16 %v152, %v148
    %v205 = vpack.c.b16 %v153, %v149
    %v206 = vpack.c.b16 %v158, %v154
    %v207 = vpack.c.b16 %v159, %v155
    %v208 = vpack.c.b16 %v160, %v156
    %v209 = vpack.c.b16 %v161, %v157
    %v210 = vpack.c.b16 %v166, %v162
    %v211 = vpack.c.b16 %v167, %v163
    %v212 = vpack.c.b16 %v168, %v164
    %v213 = vpack.c.b16 %v169, %v165
    %v214 = vpack.c.b16 %v174, %v170
    %v215 = vpack.c.b16 %v175, %v171
    %v216 = vpack.c.b16 %v176, %v172
    %v217 = vpack.c.b16 %v177, %v173
    %v218 = vpack.c.b16 %v182, %v178
    %v219 = vpack.c.b16 %v183, %v179
    %v220 = vpack.c.b16 %v184, %v180
    %v221 = vpack.c.b16 %v185, %v181
    %v222 = vpack.c.b16 %v190, %v186
    %v223 = vpack.c.b16 %v191, %v187
    %v224 = vpack.c.b16 %v192, %v188
    %v225 = vpack.c.b16 %v193, %v189
    %258 = vmatprep.subr.bf16.mxu0 %v195
    %259 = vmatpush1.bf16.msra.mxu0 %v194
    %260 = vmatprep.subr.bf16.mxu0 %v199
    %261 = vmatpush1.bf16.msra.mxu0 %v198
    %262 = vmatprep.subr.bf16.mxu0 %v203
    %263 = vmatpush1.bf16.msra.mxu0 %v202
    %264 = vmatprep.subr.bf16.mxu0 %v207
    %265 = vmatpush1.bf16.msra.mxu0 %v206
    %266 = vmatprep.subr.bf16.mxu0 %v211
    %267 = vmatpush1.bf16.msra.mxu0 %v210
    %268 = vmatprep.subr.bf16.mxu0 %v215
    %269 = vmatpush1.bf16.msra.mxu0 %v214
    %270 = vmatprep.subr.bf16.mxu0 %v219
    %271 = vmatpush1.bf16.msra.mxu0 %v218
    %272 = vmatprep.subr.bf16.mxu0 %v223
    %273 = vmatpush1.bf16.msra.mxu0 %v222
    %274 = vmatprep.subr.bf16.mxu0 0
    %275 = vmatpush1.bf16.msra.mxu0 0
    %276 = vmatprep.subr.bf16.mxu0 0
    %277 = vmatpush1.bf16.msra.mxu0 0
    %278 = vmatprep.subr.bf16.mxu0 0
    %279 = vmatpush1.bf16.msra.mxu0 0
    %280 = vmatprep.subr.bf16.mxu0 0
    %281 = vmatpush1.bf16.msra.mxu0 0
    %282 = vmatprep.subr.bf16.mxu0 0
    %283 = vmatpush1.bf16.msra.mxu0 0
    %284 = vmatprep.subr.bf16.mxu0 0
    %285 = vmatpush1.bf16.msra.mxu0 0
    %286 = vmatprep.subr.bf16.mxu0 0
    %287 = vmatpush1.bf16.msra.mxu0 0
    %288 = vmatprep.subr.bf16.mxu0 0
    %289 = vmatpush1.bf16.msra.mxu0 0
    %290 = vmatprep.mubr.bf16.mxu0 0
    %291 = vmatmul.mubr.bf16.gmra.mrb[0].mxu0 %v65
    %v292 = vpop.f32.mrb[0].mxu0
    %v293 = vadd.f32 0.0, %v292
    %v294 = vpop.f32.mrb[0].mxu0
    %v295 = vadd.f32 0.0, %v294
    %v296 = vpop.f32.mrb[0].mxu0
    %v297 = vadd.f32 0.0, %v296
    %v298 = vpop.f32.mrb[0].mxu0
    %v299 = vadd.f32 0.0, %v298
    %300 = vdwg.mxu0
    %301 = vmatprep.subr.bf16.mxu0 %v197
    %302 = vmatpush1.bf16.msra.mxu0 %v196
    %303 = vmatprep.subr.bf16.mxu0 %v201
    %304 = vmatpush1.bf16.msra.mxu0 %v200
    %305 = vmatprep.subr.bf16.mxu0 %v205
    %306 = vmatpush1.bf16.msra.mxu0 %v204
    %307 = vmatprep.subr.bf16.mxu0 %v209
    %308 = vmatpush1.bf16.msra.mxu0 %v208
    %309 = vmatprep.subr.bf16.mxu0 %v213
    %310 = vmatpush1.bf16.msra.mxu0 %v212
    %311 = vmatprep.subr.bf16.mxu0 %v217
    %312 = vmatpush1.bf16.msra.mxu0 %v216
    %313 = vmatprep.subr.bf16.mxu0 %v221
    %314 = vmatpush1.bf16.msra.mxu0 %v220
    %315 = vmatprep.subr.bf16.mxu0 %v225
    %316 = vmatpush1.bf16.msra.mxu0 %v224
    %317 = vmatprep.subr.bf16.mxu0 0
    %318 = vmatpush1.bf16.msra.mxu0 0
    %319 = vmatprep.subr.bf16.mxu0 0
    %320 = vmatpush1.bf16.msra.mxu0 0
    %321 = vmatprep.subr.bf16.mxu0 0
    %322 = vmatpush1.bf16.msra.mxu0 0
    %323 = vmatprep.subr.bf16.mxu0 0
    %324 = vmatpush1.bf16.msra.mxu0 0
    %325 = vmatprep.subr.bf16.mxu0 0
    %326 = vmatpush1.bf16.msra.mxu0 0
    %327 = vmatprep.subr.bf16.mxu0 0
    %328 = vmatpush1.bf16.msra.mxu0 0
    %329 = vmatprep.subr.bf16.mxu0 0
    %330 = vmatpush1.bf16.msra.mxu0 0
    %331 = vmatprep.subr.bf16.mxu0 0
    %332 = vmatpush1.bf16.msra.mxu0 0
    %333 = vmatprep.mubr.bf16.mxu0 0
    %334 = vmatmul.mubr.bf16.gmra.mrb[0].mxu0 %v65
    %v335 = vpop.f32.mrb[0].mxu0
    %v336 = vadd.f32 0.0, %v335
    %v337 = vpop.f32.mrb[0].mxu0
    %v338 = vadd.f32 0.0, %v337
    %v339 = vpop.f32.mrb[0].mxu0
    %v340 = vadd.f32 0.0, %v339
    %v341 = vpop.f32.mrb[0].mxu0
    %v342 = vadd.f32 0.0, %v341
    %343 = vdwg.mxu0
    %v344 = vxor.u32 %v293, 2147483648
    %v345 = vxor.u32 %v295, 2147483648
    %v346 = vxor.u32 %v297, 2147483648
    %v347 = vxor.u32 %v299, 2147483648
    %v348 = vmul.f32 %v344, 1.442695
    %v349 = vpow.pop %v348
    %v350 = vmul.f32 %v345, 1.442695
    %v351 = vpow.pop %v350
    %v352 = vmul.f32 %v346, 1.442695
    %v353 = vpow.pop %v352
    %v354 = vmul.f32 %v347, 1.442695
    %v355 = vpow.pop %v354
    %v356 = vadd.f32 %v349, 1.0
    %v357 = vadd.f32 %v351, 1.0
    %v358 = vadd.f32 %v353, 1.0
    %v359 = vadd.f32 %v355, 1.0
    %v360 = vrcp.pop %v356
    %v361 = vmul.f32 1.0, %v360
    %v362 = vrcp.pop %v357
    %v363 = vmul.f32 1.0, %v362
    %v364 = vrcp.pop %v358
    %v365 = vmul.f32 1.0, %v364
    %v366 = vrcp.pop %v359
    %v367 = vmul.f32 1.0, %v366
    %v368 = vmul.f32 %v293, %v361
    %v369 = vmul.f32 %v295, %v363
    %v370 = vmul.f32 %v297, %v365
    %v371 = vmul.f32 %v299, %v367
    %v372 = vmul.f32 %v368, %v336
    %v373 = vmul.f32 %v369, %v338
    %v374 = vmul.f32 %v370, %v340
    %v375 = vmul.f32 %v371, %v342
    %v376 = vld [vmem:[#allocation8] sm:$0xff]
    %v377 = vld [vmem:[#allocation8 + $0x8] sm:$0xff]
    %v378 = vpack.c.bf16 %v374, %v372
    %v379 = vpack.c.bf16 %v375, %v373
    %v380 = vld [vmem:[#allocation7] sm:$0xf]
    %v381 = vld [vmem:[#allocation7 + $0x4] sm:$0xf]
    %v382 = vld [vmem:[#allocation7 + $0x8] sm:$0xf]
    %v383 = vld [vmem:[#allocation7 + $0xc] sm:$0xf]
    %v384 = vld [vmem:[#allocation7 + $0x10] sm:$0xf]
    %v385 = vld [vmem:[#allocation7 + $0x14] sm:$0xf]
    %v386 = vld [vmem:[#allocation7 + $0x18] sm:$0xf]
    %v387 = vld [vmem:[#allocation7 + $0x1c] sm:$0xf]
    %v388 = vld [vmem:[#allocation7 + $0x20] sm:$0xf]
    %v389 = vld [vmem:[#allocation7 + $0x24] sm:$0xf]
    %v390 = vld [vmem:[#allocation7 + $0x28] sm:$0xf]
    %v391 = vld [vmem:[#allocation7 + $0x2c] sm:$0xf]
    %v392 = vld [vmem:[#allocation7 + $0x30] sm:$0xf]
    %v393 = vld [vmem:[#allocation7 + $0x34] sm:$0xf]
    %v394 = vld [vmem:[#allocation7 + $0x38] sm:$0xf]
    %v395 = vld [vmem:[#allocation7 + $0x3c] sm:$0xf]
    %v396 = vld [vmem:[#allocation7 + $0x40] sm:$0xf]
    %v397 = vld [vmem:[#allocation7 + $0x44] sm:$0xf]
    %v398 = vld [vmem:[#allocation7 + $0x48] sm:$0xf]
    %v399 = vld [vmem:[#allocation7 + $0x4c] sm:$0xf]
    %v400 = vld [vmem:[#allocation7 + $0x50] sm:$0xf]
    %v401 = vld [vmem:[#allocation7 + $0x54] sm:$0xf]
    %v402 = vld [vmem:[#allocation7 + $0x58] sm:$0xf]
    %v403 = vld [vmem:[#allocation7 + $0x5c] sm:$0xf]
    %v404 = vld [vmem:[#allocation7 + $0x60] sm:$0xf]
    %v405 = vld [vmem:[#allocation7 + $0x64] sm:$0xf]
    %v406 = vld [vmem:[#allocation7 + $0x68] sm:$0xf]
    %v407 = vld [vmem:[#allocation7 + $0x6c] sm:$0xf]
    %v408 = vld [vmem:[#allocation7 + $0x70] sm:$0xf]
    %v409 = vld [vmem:[#allocation7 + $0x74] sm:$0xf]
    %v410 = vld [vmem:[#allocation7 + $0x78] sm:$0xf]
    %v411 = vld [vmem:[#allocation7 + $0x7c] sm:$0xf]
    %v444 = vunpack.c.l.b16 %v380
    %v445 = vunpack.c.l.b16 %v381
    %v446 = vunpack.c.l.b16 %v382
    %v447 = vunpack.c.l.b16 %v383
    %v448 = vunpack.c.l.b16 %v384
    %v449 = vunpack.c.l.b16 %v385
    %v450 = vunpack.c.l.b16 %v386
    %v451 = vunpack.c.l.b16 %v387
    %v452 = vunpack.c.l.b16 %v388
    %v453 = vunpack.c.l.b16 %v389
    %v454 = vunpack.c.l.b16 %v390
    %v455 = vunpack.c.l.b16 %v391
    %v456 = vunpack.c.l.b16 %v392
    %v457 = vunpack.c.l.b16 %v393
    %v458 = vunpack.c.l.b16 %v394
    %v459 = vunpack.c.l.b16 %v395
    %v460 = vunpack.c.l.b16 %v396
    %v461 = vunpack.c.l.b16 %v397
    %v462 = vunpack.c.l.b16 %v398
    %v463 = vunpack.c.l.b16 %v399
    %v464 = vunpack.c.l.b16 %v400
    %v465 = vunpack.c.l.b16 %v401
    %v466 = vunpack.c.l.b16 %v402
    %v467 = vunpack.c.l.b16 %v403
    %v468 = vunpack.c.l.b16 %v404
    %v469 = vunpack.c.l.b16 %v405
    %v470 = vunpack.c.l.b16 %v406
    %v471 = vunpack.c.l.b16 %v407
    %v472 = vunpack.c.l.b16 %v408
    %v473 = vunpack.c.l.b16 %v409
    %v474 = vunpack.c.l.b16 %v410
    %v475 = vunpack.c.l.b16 %v411
    %v476 = vpack.c.b16 %v445, %v444
    %v477 = vpack.c.b16 %v447, %v446
    %v478 = vpack.c.b16 %v449, %v448
    %v479 = vpack.c.b16 %v451, %v450
    %v480 = vpack.c.b16 %v453, %v452
    %v481 = vpack.c.b16 %v455, %v454
    %v482 = vpack.c.b16 %v457, %v456
    %v483 = vpack.c.b16 %v459, %v458
    %v484 = vpack.c.b16 %v461, %v460
    %v485 = vpack.c.b16 %v463, %v462
    %v486 = vpack.c.b16 %v465, %v464
    %v487 = vpack.c.b16 %v467, %v466
    %v488 = vpack.c.b16 %v469, %v468
    %v489 = vpack.c.b16 %v471, %v470
    %v490 = vpack.c.b16 %v473, %v472
    %v491 = vpack.c.b16 %v475, %v474
    %508 = vmatprep.subr.bf16.mxu0 0
    %509 = vmatpush1.bf16.msra.mxu0 %v476
    %510 = vmatprep.subr.bf16.mxu0 0
    %511 = vmatpush1.bf16.msra.mxu0 %v477
    %512 = vmatprep.subr.bf16.mxu0 0
    %513 = vmatpush1.bf16.msra.mxu0 %v478
    %514 = vmatprep.subr.bf16.mxu0 0
    %515 = vmatpush1.bf16.msra.mxu0 %v479
    %516 = vmatprep.subr.bf16.mxu0 0
    %517 = vmatpush1.bf16.msra.mxu0 %v480
    %518 = vmatprep.subr.bf16.mxu0 0
    %519 = vmatpush1.bf16.msra.mxu0 %v481
    %520 = vmatprep.subr.bf16.mxu0 0
    %521 = vmatpush1.bf16.msra.mxu0 %v482
    %522 = vmatprep.subr.bf16.mxu0 0
    %523 = vmatpush1.bf16.msra.mxu0 %v483
    %524 = vmatprep.subr.bf16.mxu0 0
    %525 = vmatpush1.bf16.msra.mxu0 %v484
    %526 = vmatprep.subr.bf16.mxu0 0
    %527 = vmatpush1.bf16.msra.mxu0 %v485
    %528 = vmatprep.subr.bf16.mxu0 0
    %529 = vmatpush1.bf16.msra.mxu0 %v486
    %530 = vmatprep.subr.bf16.mxu0 0
    %531 = vmatpush1.bf16.msra.mxu0 %v487
    %532 = vmatprep.subr.bf16.mxu0 0
    %533 = vmatpush1.bf16.msra.mxu0 %v488
    %534 = vmatprep.subr.bf16.mxu0 0
    %535 = vmatpush1.bf16.msra.mxu0 %v489
    %536 = vmatprep.subr.bf16.mxu0 0
    %537 = vmatpush1.bf16.msra.mxu0 %v490
    %538 = vmatprep.subr.bf16.mxu0 0
    %539 = vmatpush1.bf16.msra.mxu0 %v491
    %540 = vmatprep.mubr.bf16.mxu0 %v379
    %541 = vmatmul.mubr.bf16.gmra.mrb[0].mxu0 %v378
    %v542 = vpop.f32.mrb[0].mxu0
    %v543 = vadd.f32 0.0, %v542
    %v544 = vpop.f32.mrb[0].mxu0
    %v545 = vpop.f32.mrb[0].mxu0
    %v546 = vadd.f32 0.0, %v545
    %v547 = vpop.f32.mrb[0].mxu0
    %548 = vdwg.mxu0
    %v549 = vadd.f32 %v376, %v543
    %v550 = vadd.f32 %v377, %v546
    %551 = vst [vmem:[#allocation8] sm:$0xff] %v549
    %552 = vst [vmem:[#allocation8 + $0x8] sm:$0xff] %v550
    // Predicated region
    $region30: #{tpu_custom_call.1} parent=1 // pred_check
      _
    $region31: #{tpu_custom_call.1} parent=1 // pred_check_branch
      %554 = sbr.rel (0) target = $region33
    $region32: #{tpu_custom_call.1} parent=1 // pred_region
      %s556 = ssub.s32 256, 256
      %557 = vsyncadd [#allocation4], %s556
      %s558 = sshll.u32 [#allocation8], 4
      %s559 = int_to_ptr.vmem [resolvable:$true] %s558
      %564 = dma.vmem_to_hbm [thread:$0]  %s559, 256, %s3, [#allocation4], 128, 128, 8
    $region33: #{tpu_custom_call.1} parent=1 // pred_fallthru
      _
    // Predicated region
    $region34: #{tpu_custom_call.1} parent=1 // pred_check
      _
    $region35: #{tpu_custom_call.1} parent=1 // pred_check_branch
      %566 = sbr.rel (0) target = $region37
    $region36: #{tpu_custom_call.1} parent=1 // pred_region
      %567 = dma.done [#allocation4], 256
    $region37: #{tpu_custom_call.1} parent=1 // pred_fallthru
      _
    %568 = vsyncpa [#allocation3], 1
    %569 = vsyncpa [#allocation6], 1
    %570 = vsyncpa [#allocation4], 1

</llo_original>
